<compile_context>
chip_gen: v7x
topology: tpu7x:2x2x1
jax: 0.10.0
libtpu: 0.0.40
codegen_flags: <defaults>
</compile_context>

<pallas_src>
import functools

import jax
import jax.numpy as jnp
from jax.experimental import pallas as pl
from jax.experimental.pallas import tpu as pltpu


# ----------------------------------------------------------------- fused (3D slab)
def _gcln_fused_kernel(x_ref, gamma_ref, beta_ref, o_ref, *, eps):
    # x_ref: (nb, C, T) -- nb batch elements per grid step, full (C, T) slab each.
    x = x_ref[...].astype(jnp.float32)
    inv_n = 1.0 / (x.shape[1] * x.shape[2])
    # Single-pass statistics: sum and sum of squares (one read of the slab).
    s = jnp.sum(x, axis=(1, 2), keepdims=True)             # (nb, 1, 1)
    sq = jnp.sum(x * x, axis=(1, 2), keepdims=True)        # (nb, 1, 1)
    mean = s * inv_n
    var = jnp.maximum(sq * inv_n - mean * mean, 0.0)        # clamp for fp safety
    rstd = jax.lax.rsqrt(var + eps)
    gamma = gamma_ref[...].astype(jnp.float32)[None]        # (1, C, 1)
    beta = beta_ref[...].astype(jnp.float32)[None]          # (1, C, 1)
    # Fold into per-(batch, channel) scale/bias: 2 VALU ops per element on the slab.
    scale = gamma * rstd                                    # (nb, C, 1)
    bias = beta - mean * scale                              # (nb, C, 1)
    o_ref[...] = (x * scale + bias).astype(o_ref.dtype)


def _fused_gcln(x, gamma, beta, eps, nb, vmem_limit):
    N, C, T = x.shape
    isz = x.dtype.itemsize
    kernel = functools.partial(_gcln_fused_kernel, eps=eps)
    cost = pl.CostEstimate(
        flops=8 * N * C * T,
        transcendentals=N,
        bytes_accessed=2 * N * C * T * isz + 2 * C * 4,
    )
    return pl.pallas_call(
        kernel,
        out_shape=jax.ShapeDtypeStruct((N, C, T), x.dtype),
        grid_spec=pltpu.PrefetchScalarGridSpec(
            num_scalar_prefetch=0,
            grid=(N // nb,),
            in_specs=[
                pl.BlockSpec((nb, C, T), lambda i: (i, 0, 0)),
                pl.BlockSpec((C, 1), lambda i: (0, 0)),
                pl.BlockSpec((C, 1), lambda i: (0, 0)),
            ],
            out_specs=pl.BlockSpec((nb, C, T), lambda i: (i, 0, 0)),
        ),
        compiler_params=pltpu.CompilerParams(
            dimension_semantics=("parallel",),
            vmem_limit_bytes=vmem_limit,
        ),
        cost_estimate=cost,
    )(x, gamma, beta)


# ---------------------------------------------------- fused, flattened (lane-dense)
def _gcln_fused2d_kernel(x_ref, g_ref, b_ref, o_ref, *, eps):
    # x_ref: (nb, C*T). g_ref/b_ref: (1, C*T), gamma/beta pre-broadcast over T.
    x = x_ref[...].astype(jnp.float32)
    inv_n = 1.0 / x.shape[1]
    s = jnp.sum(x, axis=1, keepdims=True)                   # (nb, 1)
    sq = jnp.sum(x * x, axis=1, keepdims=True)              # (nb, 1)
    mean = s * inv_n
    var = jnp.maximum(sq * inv_n - mean * mean, 0.0)
    rstd = jax.lax.rsqrt(var + eps)
    g = g_ref[...].astype(jnp.float32)                      # (1, CT)
    b = b_ref[...].astype(jnp.float32)                      # (1, CT)
    scale = rstd * g                                        # (nb, CT)
    o_ref[...] = (x * scale + (b - mean * scale)).astype(o_ref.dtype)


def _fused2d_gcln(x, gamma, beta, eps, nb, vmem_limit):
    N, C, T = x.shape
    CT = C * T
    isz = x.dtype.itemsize
    x2 = x.reshape(N, CT)  # contiguous reshape: layout plumbing in the wrapper
    g_flat = jnp.broadcast_to(gamma.astype(jnp.float32).reshape(C, 1),
                              (C, T)).reshape(1, CT)
    b_flat = jnp.broadcast_to(beta.astype(jnp.float32).reshape(C, 1),
                              (C, T)).reshape(1, CT)
    kernel = functools.partial(_gcln_fused2d_kernel, eps=eps)
    cost = pl.CostEstimate(
        flops=10 * N * CT,
        transcendentals=N,
        bytes_accessed=2 * N * CT * isz + 2 * CT * 4,
    )
    out = pl.pallas_call(
        kernel,
        out_shape=jax.ShapeDtypeStruct((N, CT), x.dtype),
        grid_spec=pltpu.PrefetchScalarGridSpec(
            num_scalar_prefetch=0,
            grid=(N // nb,),
            in_specs=[
                pl.BlockSpec((nb, CT), lambda i: (i, 0)),
                pl.BlockSpec((1, CT), lambda i: (0, 0)),
                pl.BlockSpec((1, CT), lambda i: (0, 0)),
            ],
            out_specs=pl.BlockSpec((nb, CT), lambda i: (i, 0)),
        ),
        compiler_params=pltpu.CompilerParams(
            dimension_semantics=("parallel",),
            vmem_limit_bytes=vmem_limit,
        ),
        cost_estimate=cost,
    )(x2, g_flat, b_flat)
    return out.reshape(N, C, T)


# ------------------------------------------------------------------ tiled, 2-phase
def _gcln_stats_kernel(x_ref, part_ref, *, T, tile_t, needs_mask):
    # Grid (N, nT). part_ref: (1, 2, tile_t) stays resident across the T axis (same
    # output block for every t) and accumulates per-lane partial sum / sumsq.
    t = pl.program_id(1)

    @pl.when(t == 0)
    def _init():
        part_ref[...] = jnp.zeros_like(part_ref)

    x = x_ref[...].astype(jnp.float32)                      # (1, C, tile_t)

    def accum(xv):
        part_ref[:, 0:1, :] += jnp.sum(xv, axis=1, keepdims=True)
        part_ref[:, 1:2, :] += jnp.sum(xv * xv, axis=1, keepdims=True)

    if needs_mask:
        # Only the ragged last tile pays the compare/select; full tiles run clean.
        n_last = pl.num_programs(1) - 1

        @pl.when(t < n_last)
        def _full():
            accum(x)

        @pl.when(t == n_last)
        def _ragged():
            col = jax.lax.broadcasted_iota(jnp.int32, x.shape, 2)
            accum(jnp.where(col + t * tile_t < T, x, 0.0))
    else:
        accum(x)


def _gcln_apply_kernel(x_ref, scale_ref, bias_ref, o_ref):
    # y = x * scale + bias with folded per-(batch, channel) scale/bias.
    x = x_ref[...].astype(jnp.float32)                      # (1, C, tile_t)
    o_ref[...] = (x * scale_ref[...] + bias_ref[...]).astype(o_ref.dtype)


def _tiled_gcln(x, gamma, beta, eps, tile_t, vmem_limit):
    N, C, T = x.shape
    isz = x.dtype.itemsize
    n_t = -(-T // tile_t)
    needs_mask = (T % tile_t) != 0

    stats_kernel = functools.partial(
        _gcln_stats_kernel, T=T, tile_t=tile_t, needs_mask=needs_mask)
    partials = pl.pallas_call(
        stats_kernel,
        out_shape=jax.ShapeDtypeStruct((N, 2, tile_t), jnp.float32),
        grid_spec=pltpu.PrefetchScalarGridSpec(
            num_scalar_prefetch=0,
            grid=(N, n_t),
            in_specs=[pl.BlockSpec((1, C, tile_t), lambda n, t: (n, 0, t))],
            out_specs=pl.BlockSpec((1, 2, tile_t), lambda n, t: (n, 0, 0)),
        ),
        compiler_params=pltpu.CompilerParams(
            dimension_semantics=("parallel", "arbitrary"),
            vmem_limit_bytes=vmem_limit,
        ),
        cost_estimate=pl.CostEstimate(
            flops=3 * N * C * T, transcendentals=0,
            bytes_accessed=N * C * T * isz),
    )(x)

    # Finalize the tiny per-batch statistics and fold gamma/beta/mean/rstd into
    # per-(batch, channel) scale/bias outside the kernel (N*C elements: negligible).
    inv_n = 1.0 / (C * T)
    sums = jnp.sum(partials, axis=-1)                       # (N, 2)
    mean = sums[:, 0] * inv_n                               # (N,)
    var = jnp.maximum(sums[:, 1] * inv_n - mean * mean, 0.0)
    rstd = jax.lax.rsqrt(var + eps)                         # (N,)
    g = gamma.reshape(1, C).astype(jnp.float32)
    b = beta.reshape(1, C).astype(jnp.float32)
    scale = (g * rstd[:, None])[:, :, None]                 # (N, C, 1)
    bias = (b - mean[:, None] * (g * rstd[:, None]))[:, :, None]

    return pl.pallas_call(
        _gcln_apply_kernel,
        out_shape=jax.ShapeDtypeStruct((N, C, T), x.dtype),
        grid_spec=pltpu.PrefetchScalarGridSpec(
            num_scalar_prefetch=0,
            grid=(N, n_t),
            in_specs=[
                pl.BlockSpec((1, C, tile_t), lambda n, t: (n, 0, t)),
                pl.BlockSpec((1, C, 1), lambda n, t: (n, 0, 0)),
                pl.BlockSpec((1, C, 1), lambda n, t: (n, 0, 0)),
            ],
            out_specs=pl.BlockSpec((1, C, tile_t), lambda n, t: (n, 0, t)),
        ),
        compiler_params=pltpu.CompilerParams(
            dimension_semantics=("parallel", "parallel"),
            vmem_limit_bytes=vmem_limit,
        ),
        cost_estimate=pl.CostEstimate(
            flops=2 * N * C * T, transcendentals=0,
            bytes_accessed=2 * N * C * T * isz),
    )(x, scale, bias)


# ------------------------------------------------------------------ plan selection
def _vmem_capacity_bytes():
    try:
        return int(pltpu.get_tpu_info().vmem_capacity_bytes)
    except Exception:
        return 64 * 1024 * 1024  # conservative default (v7x per-core VMEM)


def _pick_nb_flat(N, cap):
    # For the flattened (nb, C*T) layout, nb is a tiled (sublane) dim: keep it
    # either equal to N (full-extent exception) or a multiple of 8 dividing N.
    if cap >= N:
        return N
    k = (cap // 8) * 8
    while k >= 8:
        if N % k == 0:
            return k
        k -= 8
    return None


def _plan(N, C, T, itemsize, force_tiled=False, tile_t=None):
    vmem_cap = _vmem_capacity_bytes()
    vmem_limit = min(vmem_cap * 3 // 4, 96 * 1024 * 1024)
    budget = vmem_limit // 3  # working-set target: leave room for double buffering

    # Fused-path per-batch cost: double-buffered input + output + f32 temporaries.
    per_batch = C * T * (2 * itemsize + 2 * itemsize + 2 * 4)
    if not force_tiled and per_batch <= budget:
        cap = max(1, min(N, budget // per_batch))
        if T < 128:
            # Lane-sparse T: use the flattened (N, C*T) layout for dense stores.
            nb = _pick_nb_flat(N, cap)
            if nb is not None:
                return ("fused2d", nb, vmem_limit)
        nb = cap
        while N % nb:  # keep batch blocks evenly dividing N
            nb -= 1
        return ("fused", nb, vmem_limit)

    # Tiled path: lane-dense T tiles (multiple of 128), aim for 512-2048 lanes.
    if tile_t is None:
        per_col = C * (2 * itemsize + 2 * itemsize + 2 * 4)
        tile_t = (budget // per_col) // 128 * 128
        tile_t = max(128, min(tile_t, 2048))
        tile_t = min(tile_t, -(-T // 128) * 128)
    return ("tiled", tile_t, vmem_limit)


def global_channel_layer_norm(x, gamma=None, beta=None, eps=1e-05,
                              force_tiled=False, tile_t=None):
    """x: (N, C, T); gamma, beta: (C, 1). None params => elementwise_affine=False."""
    N, C, T = x.shape
    if gamma is None:
        gamma = jnp.ones((C, 1), jnp.float32)
    if beta is None:
        beta = jnp.zeros((C, 1), jnp.float32)
    gamma = jnp.asarray(gamma).reshape(C, 1)
    beta = jnp.asarray(beta).reshape(C, 1)
    mode, param, vmem_limit = _plan(N, C, T, x.dtype.itemsize,
                                    force_tiled=force_tiled, tile_t=tile_t)
    if mode == "fused2d":
        return _fused2d_gcln(x, gamma, beta, eps, param, vmem_limit)
    if mode == "fused":
        return _fused_gcln(x, gamma, beta, eps, param, vmem_limit)
    return _tiled_gcln(x, gamma, beta, eps, param, vmem_limit)


# ---------------------------------------------------------------------- reference
def _reference(x, gamma, beta, eps=1e-05):
    x32 = x.astype(jnp.float32)
    mean = jnp.mean(x32, axis=(1, 2), keepdims=True)
    var = jnp.mean((x32 - mean) ** 2, axis=(1, 2), keepdims=True)
    y = (gamma[None].astype(jnp.float32) * (x32 - mean) / jnp.sqrt(var + eps)
         + beta[None].astype(jnp.float32))
    return y.astype(x.dtype)


if __name__ == "__main__":
    key = jax.random.PRNGKey(0)
    ks = jax.random.split(key, 6)

    # 1) Small, lane-sparse T (N x C x T as in the module) -> flattened fused path.
    N, C, T = 2, 4, 16
    x = jax.random.normal(ks[0], (N, C, T), dtype=jnp.float32)
    gamma = 1.0 + 0.1 * jax.random.normal(ks[1], (C, 1), dtype=jnp.float32)
    beta = 0.1 * jax.random.normal(ks[2], (C, 1), dtype=jnp.float32)
    out = jax.block_until_ready(global_channel_layer_norm(x, gamma, beta))
    ref = _reference(x, gamma, beta)
    assert out.shape == (N, C, T)
    assert jnp.allclose(out, ref, atol=1e-4, rtol=1e-4), "fused2d path mismatch"

    # 2) Lane-dense T -> 3-D fused whole-slab path (also checks affine=False).
    N2, C2, T2 = 2, 8, 256
    x2 = jax.random.normal(ks[3], (N2, C2, T2), dtype=jnp.float32)
    out2 = jax.block_until_ready(global_channel_layer_norm(x2))
    ref2 = _reference(x2, jnp.ones((C2, 1), jnp.float32),
                      jnp.zeros((C2, 1), jnp.float32))
    assert out2.shape == (N2, C2, T2)
    assert jnp.allclose(out2, ref2, atol=1e-4, rtol=1e-4), "fused path mismatch"

    # 3) Forced two-phase T-tiled path with a ragged last tile (mask branch).
    N3, C3, T3 = 2, 8, 320
    x3 = jax.random.normal(ks[4], (N3, C3, T3), dtype=jnp.float32)
    gamma3 = 1.0 + 0.1 * jax.random.normal(ks[5], (C3, 1), dtype=jnp.float32)
    beta3 = 0.05 * jnp.ones((C3, 1), dtype=jnp.float32)
    out3 = jax.block_until_ready(
        global_channel_layer_norm(x3, gamma3, beta3, force_tiled=True, tile_t=128))
    ref3 = _reference(x3, gamma3, beta3)
    assert out3.shape == (N3, C3, T3)
    assert jnp.allclose(out3, ref3, atol=1e-4, rtol=1e-4), "tiled path mismatch"

    print("KERNEL_OK")
</pallas_src>

<mosaic_0001>
module attributes {stable_mosaic.version = 11 : i64} {
  func.func @_gcln_fused2d_kernel(%arg0: i32, %arg1: memref<2x64xf32, #tpu.memory_space<vmem>>, %arg2: memref<1x64xf32, #tpu.memory_space<vmem>>, %arg3: memref<1x64xf32, #tpu.memory_space<vmem>>, %arg4: memref<2x64xf32, #tpu.memory_space<vmem>>) attributes {dimension_semantics = [#tpu.dimension_semantics<parallel>], iteration_bounds = array<i64: 1>, scalar_prefetch = 0 : i64, scratch_operands = 0 : i64, tpu.core_type = #tpu.core_type<tc>, window_params = [{transform_indices = @transform_0, window_bounds = array<i64: 2, 64>}, {pipeline_mode = #tpu.pipeline_mode<synchronous>, transform_indices = @transform_1, window_bounds = array<i64: 1, 64>}, {pipeline_mode = #tpu.pipeline_mode<synchronous>, transform_indices = @transform_2, window_bounds = array<i64: 1, 64>}, {transform_indices = @transform_3, window_bounds = array<i64: 2, 64>}]} {
    %c0 = arith.constant 0 : index
    %c0_0 = arith.constant 0 : index
    %0 = vector.load %arg1[%c0, %c0_0] : memref<2x64xf32, #tpu.memory_space<vmem>>, vector<2x64xf32>
    %cst = arith.constant dense<0.000000e+00> : vector<2xf32>
    %1 = vector.multi_reduction <add>, %0, %cst [1] : vector<2x64xf32> to vector<2xf32>
    %2 = vector.shape_cast %1 : vector<2xf32> to vector<2x1xf32>
    %3 = arith.mulf %0, %0 : vector<2x64xf32>
    %cst_1 = arith.constant dense<0.000000e+00> : vector<2xf32>
    %4 = vector.multi_reduction <add>, %3, %cst_1 [1] : vector<2x64xf32> to vector<2xf32>
    %5 = vector.shape_cast %4 : vector<2xf32> to vector<2x1xf32>
    %cst_2 = arith.constant 1.562500e-02 : f32
    %6 = vector.broadcast %cst_2 : f32 to vector<2x1xf32>
    %7 = arith.mulf %2, %6 : vector<2x1xf32>
    %cst_3 = arith.constant 1.562500e-02 : f32
    %8 = vector.broadcast %cst_3 : f32 to vector<2x1xf32>
    %9 = arith.mulf %5, %8 : vector<2x1xf32>
    %10 = arith.mulf %7, %7 : vector<2x1xf32>
    %11 = arith.subf %9, %10 : vector<2x1xf32>
    %cst_4 = arith.constant 0.000000e+00 : f32
    %12 = vector.broadcast %cst_4 : f32 to vector<2x1xf32>
    %13 = arith.maximumf %11, %12 : vector<2x1xf32>
    %cst_5 = arith.constant 9.99999974E-6 : f32
    %14 = vector.broadcast %cst_5 : f32 to vector<2x1xf32>
    %15 = arith.addf %13, %14 : vector<2x1xf32>
    %16 = math.rsqrt %15 : vector<2x1xf32>
    %c0_6 = arith.constant 0 : index
    %c0_7 = arith.constant 0 : index
    %17 = vector.load %arg2[%c0_6, %c0_7] : memref<1x64xf32, #tpu.memory_space<vmem>>, vector<1x64xf32>
    %c0_8 = arith.constant 0 : index
    %c0_9 = arith.constant 0 : index
    %18 = vector.load %arg3[%c0_8, %c0_9] : memref<1x64xf32, #tpu.memory_space<vmem>>, vector<1x64xf32>
    %19 = vector.broadcast %16 : vector<2x1xf32> to vector<2x64xf32>
    %20 = vector.broadcast %17 : vector<1x64xf32> to vector<2x64xf32>
    %21 = arith.mulf %19, %20 : vector<2x64xf32>
    %22 = arith.mulf %0, %21 : vector<2x64xf32>
    %23 = vector.broadcast %7 : vector<2x1xf32> to vector<2x64xf32>
    %24 = arith.mulf %23, %21 : vector<2x64xf32>
    %25 = vector.broadcast %18 : vector<1x64xf32> to vector<2x64xf32>
    %26 = arith.subf %25, %24 : vector<2x64xf32>
    %27 = arith.addf %22, %26 : vector<2x64xf32>
    %c0_10 = arith.constant 0 : index
    %c0_11 = arith.constant 0 : index
    %28 = vector.load %arg4[%c0_10, %c0_11] : memref<2x64xf32, #tpu.memory_space<vmem>>, vector<2x64xf32>
    tpu.vector_store %arg4[%c0_10, %c0_11], %27 {strides = array<i32>} : memref<2x64xf32, #tpu.memory_space<vmem>>, vector<2x64xf32>,
    return
  }
  func.func @transform_0(%arg0: i32) -> (i32, i32) {
    %c0_i32 = arith.constant 0 : i32
    %c0_i32_0 = arith.constant 0 : i32
    return %arg0, %c0_i32 : i32, i32
  }
  func.func @transform_1(%arg0: i32) -> (i32, i32) {
    %c0_i32 = arith.constant 0 : i32
    %c0_i32_0 = arith.constant 0 : i32
    %c0_i32_1 = arith.constant 0 : i32
    return %c0_i32, %c0_i32_0 : i32, i32
  }
  func.func @transform_2(%arg0: i32) -> (i32, i32) {
    %c0_i32 = arith.constant 0 : i32
    %c0_i32_0 = arith.constant 0 : i32
    %c0_i32_1 = arith.constant 0 : i32
    return %c0_i32, %c0_i32_0 : i32, i32
  }
  func.func @transform_3(%arg0: i32) -> (i32, i32) {
    %c0_i32 = arith.constant 0 : i32
    %c0_i32_0 = arith.constant 0 : i32
    return %arg0, %c0_i32 : i32, i32
  }
}

</mosaic_0001>

<llo_original>
// kernel: tpu_custom_call.1
$region0: #{tpu_custom_call.1}
  #allocation0 [shape = 'u32[]', space=smem, size = 0x4, offset = 0x4, fixed_abs, tag = 'smem constant byte address 0x4 - core index']
  #allocation1 [shape = 'u32[144,128]{1,0:T(1,128)}', space=vmem, size = 0x12000, scoped, tag = 'internal scratch']
  %s0 = inlined_call_operand.hbm [shape: f32[2,64], index: 0, kind: input, shape index: {}]
  %s1 = inlined_call_operand.vmem [shape: f32[1,64], index: 1, kind: input, shape index: {}]
  %s2 = inlined_call_operand.vmem [shape: f32[1,64], index: 2, kind: input, shape index: {}]
  %s3 = inlined_call_operand.hbm [shape: f32[2,64], index: 3, kind: output, shape index: {}]
  %s4 = sld [smem:[#allocation0]]
  $region26: #{tpu_custom_call.1} parent=0
    _
  %s6 = ssub.s32 1, %s4
  %s7 = scalar_select 0, %s6, %s4
  $region1: #{tpu_custom_call.1} parent=0
    #allocation2 [shape = 'u8[1024]{0}', space=vmem, size = 0x400, scoped, tag = 'input window, operand 0, single buffered']
    #allocation3 [shape = 's32[1]{0}', space=sflag, size = 0x4, scoped, tag = 'scoped memory for tpu_custom_call.1']
    #allocation4 [shape = 's32[1]{0}', space=sflag, size = 0x4, scoped, tag = 'scoped memory for tpu_custom_call.1']
    #allocation5 [shape = 'u8[1024]{0}', space=vmem, size = 0x400, scoped, tag = 'output window, operand 0, single buffered']
    %8 = vsyncpa [#allocation3], 0
    %9 = vsyncpa [#allocation4], 0
    // Predicated region
    $region2: #{tpu_custom_call.1} parent=1 // pred_check
      _
    $region3: #{tpu_custom_call.1} parent=1 // pred_check_branch
      %11 = sbr.rel (0) target = $region5
    $region4: #{tpu_custom_call.1} parent=1 // pred_region
      %s13 = ssub.s32 32, 32
      %14 = vsyncadd [#allocation3], %s13
      %s16 = sshll.u32 [#allocation2], 4
      %s17 = int_to_ptr.vmem [resolvable:$true] %s16
      %19 = dma.hbm_to_vmem [thread:$0]  %s0, 32, %s17, [#allocation3]
    $region5: #{tpu_custom_call.1} parent=1 // pred_fallthru
      _
    // Predicated region
    $region6: #{tpu_custom_call.1} parent=1 // pred_check
      _
    $region7: #{tpu_custom_call.1} parent=1 // pred_check_branch
      %21 = sbr.rel (0) target = $region9
    $region8: #{tpu_custom_call.1} parent=1 // pred_region
      _
    $region9: #{tpu_custom_call.1} parent=1 // pred_fallthru
      _
    // Predicated region
    $region10: #{tpu_custom_call.1} parent=1 // pred_check
      _
    $region11: #{tpu_custom_call.1} parent=1 // pred_check_branch
      %23 = sbr.rel (0) target = $region13
    $region12: #{tpu_custom_call.1} parent=1 // pred_region
      _
    $region13: #{tpu_custom_call.1} parent=1 // pred_fallthru
      _
    // Predicated region
    $region14: #{tpu_custom_call.1} parent=1 // pred_check
      _
    $region15: #{tpu_custom_call.1} parent=1 // pred_check_branch
      %25 = sbr.rel (0) target = $region17
    $region16: #{tpu_custom_call.1} parent=1 // pred_region
      %26 = dma.done [#allocation3], 32
    $region17: #{tpu_custom_call.1} parent=1 // pred_fallthru
      _
    %v27 = vld [vmem:[#allocation2] sm:$0x3]
    %vm28 = vcmask 517120
    %v29 = vsel %vm28, %v27, 0.0
    %30 = vadd.xlane.f32.xlu0 %v29
    %v31 = vpop.xlane.xlu0 %30
    %v32 = vmul.f32 %v27, %v27
    %v33 = vsel %vm28, %v32, 0.0
    %34 = vadd.xlane.f32.xlu0 %v33
    %v35 = vpop.xlane.xlu0 %34
    %v36 = vmul.f32 %v31, 0.015625
    %v37 = vmul.f32 %v35, 0.015625
    %v38 = vmul.f32 %v36, %v36
    %v39 = vsub.f32 %v37, %v38
    %v40 = vmax.f32 %v39, 0.0
    %v41 = vadd.f32 %v40, 1e-05
    %v42 = vrsqrt.pop %v41
    %v43 = vld [vmem:[%s1] sm:$0x1]
    %v44 = vld [vmem:[%s2] sm:$0x1]
    %v46 = vlaneseq
    %v47 = vshrl.u32 %v46, 7
    %v48 = vsub.s32 0, %v47
    %v49 = vrot.slane %v43, %v48
    %v51 = vmul.f32 %v42, %v49
    %v52 = vmul.f32 %v27, %v51
    %v53 = vmul.f32 %v36, %v51
    %v55 = vlaneseq
    %v56 = vshrl.u32 %v55, 7
    %v57 = vsub.s32 0, %v56
    %v58 = vrot.slane %v44, %v57
    %v60 = vsub.f32 %v58, %v53
    %v61 = vadd.f32 %v52, %v60
    %62 = vst.msk [vmem:[#allocation5] sm:$0x3] %vm28, %v61
    // Predicated region
    $region18: #{tpu_custom_call.1} parent=1 // pred_check
      _
    $region19: #{tpu_custom_call.1} parent=1 // pred_check_branch
      %64 = sbr.rel (0) target = $region21
    $region20: #{tpu_custom_call.1} parent=1 // pred_region
      %s66 = ssub.s32 32, 32
      %67 = vsyncadd [#allocation4], %s66
      %s69 = sshll.u32 [#allocation5], 4
      %s70 = int_to_ptr.vmem [resolvable:$true] %s69
      %72 = dma.vmem_to_hbm [thread:$0]  %s70, 32, %s3, [#allocation4]
    $region21: #{tpu_custom_call.1} parent=1 // pred_fallthru
      _
    // Predicated region
    $region22: #{tpu_custom_call.1} parent=1 // pred_check
      _
    $region23: #{tpu_custom_call.1} parent=1 // pred_check_branch
      %74 = sbr.rel (0) target = $region25
    $region24: #{tpu_custom_call.1} parent=1 // pred_region
      %75 = dma.done [#allocation4], 32
    $region25: #{tpu_custom_call.1} parent=1 // pred_fallthru
      _
    %76 = vsyncpa [#allocation3], 1
    %77 = vsyncpa [#allocation4], 1

</llo_original>
